<compile_context>
chip_gen: v5e
topology: v5e:2x2
jax: 0.10.0
libtpu: 0.0.40
codegen_flags: <defaults>
</compile_context>

<pallas_src>
import functools

import jax
import jax.numpy as jnp
from jax import lax
from jax.experimental import pallas as pl
from jax.experimental.pallas import tpu as pltpu

EPS = 1e-5


def _network_dos_kernel(
    # inputs
    xT_ref,                 # [S, TB]   feature-major x tile
    g0_ref, b0_ref,         # [S, 1]    bn0 gamma / beta
    w1_ref, b1_ref,         # [H, S], [H, 1]
    g2_ref, b2_ref,         # [H, 1]    bn2 gamma / beta
    w3_ref, b3_ref,         # [H, 1], [1, 1]
    # outputs
    out_ref,                # [1, TB]   lane-dense output tile
    # scratch (persists across the whole grid)
    sum0_ref, sumsq0_ref,   # [S, 1]
    sum2_ref, sumsq2_ref,   # [H, 1]
    h_ref,                  # [NT, H, TB] resident post-LeakyReLU activations
    *, batch, tile_b):
    phase = pl.program_id(0)
    t = pl.program_id(1)
    inv_n = jnp.float32(1.0 / batch)

    # Lane mask: padded batch columns (only in the last tile) must not
    # contaminate the BatchNorm statistics.
    col = t * tile_b + lax.broadcasted_iota(jnp.int32, (1, tile_b), 1)
    mask = col < batch                                     # [1, TB]

    @pl.when(jnp.logical_and(phase == 0, t == 0))
    def _init():
        sum0_ref[...] = jnp.zeros_like(sum0_ref)
        sumsq0_ref[...] = jnp.zeros_like(sumsq0_ref)
        sum2_ref[...] = jnp.zeros_like(sum2_ref)
        sumsq2_ref[...] = jnp.zeros_like(sumsq2_ref)

    # ---- phase 0: accumulate bn0 statistics over the batch (lanes) --------
    @pl.when(phase == 0)
    def _phase0():
        x = jnp.where(mask, xT_ref[...], 0.0)
        sum0_ref[...] += jnp.sum(x, axis=1, keepdims=True)
        sumsq0_ref[...] += jnp.sum(x * x, axis=1, keepdims=True)

    # ---- phase 1: bn0 -> layer1 -> LeakyReLU; accumulate bn2 statistics ----
    @pl.when(phase == 1)
    def _phase1():
        mu0 = sum0_ref[...] * inv_n
        var0 = sumsq0_ref[...] * inv_n - mu0 * mu0         # biased variance
        scale0 = lax.rsqrt(var0 + EPS) * g0_ref[...]       # [S, 1]

        xn = (xT_ref[...] - mu0) * scale0 + b0_ref[...]    # [S, TB]
        # layer1: W1 [H, S] @ xn [S, TB] — PyTorch layout, no transpose.
        h = jnp.dot(w1_ref[...], xn,
                    preferred_element_type=jnp.float32) + b1_ref[...]
        h = jnp.where(h > 0, h, 0.5 * h)                   # LeakyReLU(0.5)

        h_ref[t] = h                                       # keep resident

        hm = jnp.where(mask, h, 0.0)
        sum2_ref[...] += jnp.sum(hm, axis=1, keepdims=True)
        sumsq2_ref[...] += jnp.sum(hm * hm, axis=1, keepdims=True)

    # ---- phase 2: bn2 -> layer3 (VPU mul + sublane reduce) -> sigmoid ------
    @pl.when(phase == 2)
    def _phase2():
        mu2 = sum2_ref[...] * inv_n
        var2 = sumsq2_ref[...] * inv_n - mu2 * mu2
        scale2 = lax.rsqrt(var2 + EPS) * g2_ref[...]       # [H, 1]

        hn = (h_ref[t] - mu2) * scale2 + b2_ref[...]       # [H, TB]
        # layer3 (H -> 1): broadcast-multiply + reduce over H instead of a
        # degenerate N=1 MXU matmul.
        y = jnp.sum(hn * w3_ref[...], axis=0, keepdims=True) + b3_ref[...]
        out_ref[...] = jax.nn.sigmoid(y)                   # [1, TB]


def network_dos_forward(x, params, *, tile_b=128):
    """x: [B, nb_stocks] float32 -> [B, 1] float32."""
    B, S = x.shape
    H = params["w1"].shape[0]

    nt = -(-B // tile_b)                 # number of batch tiles
    b_pad = nt * tile_b

    # Feature-major (batch on lanes), zero-padded to a whole number of tiles.
    xT = jnp.zeros((S, b_pad), jnp.float32).at[:, :B].set(x.T.astype(jnp.float32))

    # Pack parameters as feature-major column vectors; weights already in the
    # layout the kernel multiplies directly (no in-kernel transposes).
    g0 = params["gamma0"].reshape(S, 1).astype(jnp.float32)
    b0 = params["beta0"].reshape(S, 1).astype(jnp.float32)
    w1 = params["w1"].astype(jnp.float32)                  # [H, S] (PyTorch)
    b1 = params["b1"].reshape(H, 1).astype(jnp.float32)
    g2 = params["gamma2"].reshape(H, 1).astype(jnp.float32)
    b2 = params["beta2"].reshape(H, 1).astype(jnp.float32)
    w3 = params["w3"].reshape(H, 1).astype(jnp.float32)    # [1, H] -> [H, 1]
    b3 = params["b3"].reshape(1, 1).astype(jnp.float32)

    # Keep the resident h buffer comfortably inside scoped VMEM (v7x has only
    # 64 MiB physical / 32 MiB default scoped — size against the smallest).
    h_bytes = nt * H * tile_b * 4
    assert h_bytes <= 16 * 1024 * 1024, "h buffer too large for VMEM residency"
    # TODO(synk): for batches where h does not fit VMEM, round-trip h through
    # an HBM scratch output instead of the resident VMEM buffer.

    def full(a):
        return pl.BlockSpec(a.shape, lambda p, t: (0, 0))

    kernel = functools.partial(_network_dos_kernel, batch=B, tile_b=tile_b)

    out = pl.pallas_call(
        kernel,
        out_shape=jax.ShapeDtypeStruct((1, b_pad), jnp.float32),
        grid=(3, nt),                                   # (phase, batch tile)
        in_specs=[
            pl.BlockSpec((S, tile_b), lambda p, t: (0, t)),   # x tile
            full(g0), full(b0),
            full(w1), full(b1),
            full(g2), full(b2),
            full(w3), full(b3),
        ],
        out_specs=pl.BlockSpec((1, tile_b), lambda p, t: (0, t)),
        scratch_shapes=[
            pltpu.VMEM((S, 1), jnp.float32),            # sum0
            pltpu.VMEM((S, 1), jnp.float32),            # sumsq0
            pltpu.VMEM((H, 1), jnp.float32),            # sum2
            pltpu.VMEM((H, 1), jnp.float32),            # sumsq2
            pltpu.VMEM((nt, H, tile_b), jnp.float32),   # resident h
        ],
        compiler_params=pltpu.CompilerParams(
            # Both axes carry state (BN accumulators / resident h), so they
            # must remain sequential; batch-parallel megacore would require
            # splitting stats into a separate pallas_call.
            dimension_semantics=("arbitrary", "arbitrary"),
            vmem_limit_bytes=32 * 1024 * 1024,
        ),
    )(xT, g0, b0, w1, b1, g2, b2, w3, b3)

    return out[0, :B].reshape(B, 1)


def init_params(key, nb_stocks, hidden_size):
    """Deterministic synthetic parameters (PyTorch NetworkDOS shapes)."""
    ks = jax.random.split(key, 8)
    S, H = nb_stocks, hidden_size
    return {
        # bn0 affine (nontrivial so the normalization path is exercised)
        "gamma0": 1.0 + 0.1 * jax.random.normal(ks[0], (S,), jnp.float32),
        "beta0":  0.1 * jax.random.normal(ks[1], (S,), jnp.float32),
        # layer1: Linear(nb_stocks -> H), PyTorch weight layout [H, S]
        "w1": jax.random.normal(ks[2], (H, S), jnp.float32) / jnp.sqrt(S),
        "b1": 0.1 * jax.random.normal(ks[3], (H,), jnp.float32),
        # bn2 affine over H features
        "gamma2": 1.0 + 0.1 * jax.random.normal(ks[4], (H,), jnp.float32),
        "beta2":  0.1 * jax.random.normal(ks[5], (H,), jnp.float32),
        # layer3: Linear(H -> 1), PyTorch weight layout [1, H]
        "w3": jax.random.normal(ks[6], (1, H), jnp.float32) / jnp.sqrt(H),
        "b3": 0.1 * jax.random.normal(ks[7], (1,), jnp.float32),
    }


def network_dos_ref(x, p):
    """Pure-JAX reference (training-mode batch norm), batch-major like PyTorch."""
    mu0 = x.mean(0, keepdims=True)
    v0 = ((x - mu0) ** 2).mean(0, keepdims=True)
    h = (x - mu0) / jnp.sqrt(v0 + EPS) * p["gamma0"] + p["beta0"]
    h = h @ p["w1"].T + p["b1"]
    h = jnp.where(h > 0, h, 0.5 * h)
    mu2 = h.mean(0, keepdims=True)
    v2 = ((h - mu2) ** 2).mean(0, keepdims=True)
    h = (h - mu2) / jnp.sqrt(v2 + EPS) * p["gamma2"] + p["beta2"]
    y = h @ p["w3"].T + p["b3"]
    return jax.nn.sigmoid(y)


if __name__ == "__main__":
    NB_STOCKS = 4
    HIDDEN = 10          # module default hidden_size
    BATCH = 200          # spans two 128-lane batch tiles; last tile is masked

    key = jax.random.PRNGKey(0)
    kx, kp = jax.random.split(key)
    x = jax.random.normal(kx, (BATCH, NB_STOCKS), jnp.float32)
    params = init_params(kp, NB_STOCKS, HIDDEN)

    out = jax.block_until_ready(network_dos_forward(x, params))
    ref = network_dos_ref(x, params)

    assert out.shape == (BATCH, 1)
    assert jnp.allclose(out, ref, atol=1e-5, rtol=1e-5), (out[:4], ref[:4])

    print("KERNEL_OK")
</pallas_src>

<mosaic_0001>
module attributes {stable_mosaic.version = 11 : i64} {
  func.func @_network_dos_kernel(%arg0: i32, %arg1: i32, %arg2: memref<4x128xf32, #tpu.memory_space<vmem>>, %arg3: memref<4x1xf32, #tpu.memory_space<vmem>>, %arg4: memref<4x1xf32, #tpu.memory_space<vmem>>, %arg5: memref<10x4xf32, #tpu.memory_space<vmem>>, %arg6: memref<10x1xf32, #tpu.memory_space<vmem>>, %arg7: memref<10x1xf32, #tpu.memory_space<vmem>>, %arg8: memref<10x1xf32, #tpu.memory_space<vmem>>, %arg9: memref<10x1xf32, #tpu.memory_space<vmem>>, %arg10: memref<1x1xf32, #tpu.memory_space<vmem>>, %arg11: memref<1x128xf32, #tpu.memory_space<vmem>>, %arg12: memref<4x1xf32, #tpu.memory_space<vmem>>, %arg13: memref<4x1xf32, #tpu.memory_space<vmem>>, %arg14: memref<10x1xf32, #tpu.memory_space<vmem>>, %arg15: memref<10x1xf32, #tpu.memory_space<vmem>>, %arg16: memref<2x10x128xf32, #tpu.memory_space<vmem>>) attributes {dimension_semantics = [#tpu.dimension_semantics<arbitrary>, #tpu.dimension_semantics<arbitrary>], iteration_bounds = array<i64: 3, 2>, scalar_prefetch = 0 : i64, scratch_operands = 5 : i64, tpu.core_type = #tpu.core_type<tc>, window_params = [{transform_indices = @transform_0, window_bounds = array<i64: 4, 128>}, {pipeline_mode = #tpu.pipeline_mode<synchronous>, transform_indices = @transform_1, window_bounds = array<i64: 4, 1>}, {pipeline_mode = #tpu.pipeline_mode<synchronous>, transform_indices = @transform_2, window_bounds = array<i64: 4, 1>}, {pipeline_mode = #tpu.pipeline_mode<synchronous>, transform_indices = @transform_3, window_bounds = array<i64: 10, 4>}, {pipeline_mode = #tpu.pipeline_mode<synchronous>, transform_indices = @transform_4, window_bounds = array<i64: 10, 1>}, {pipeline_mode = #tpu.pipeline_mode<synchronous>, transform_indices = @transform_5, window_bounds = array<i64: 10, 1>}, {pipeline_mode = #tpu.pipeline_mode<synchronous>, transform_indices = @transform_6, window_bounds = array<i64: 10, 1>}, {pipeline_mode = #tpu.pipeline_mode<synchronous>, transform_indices = @transform_7, window_bounds = array<i64: 10, 1>}, {pipeline_mode = #tpu.pipeline_mode<synchronous>, transform_indices = @transform_8, window_bounds = array<i64: 1, 1>}, {transform_indices = @transform_9, window_bounds = array<i64: 1, 128>}]} {
    %c128_i32 = arith.constant 128 : i32
    %0 = arith.muli %arg1, %c128_i32 : i32
    %1 = tpu.iota {dimensions = array<i32: 1>} : vector<1x128xi32>
    %2 = vector.broadcast %0 : i32 to vector<1x128xi32>
    %3 = arith.addi %2, %1 : vector<1x128xi32>
    %c200_i32 = arith.constant 200 : i32
    %4 = vector.broadcast %c200_i32 : i32 to vector<1x128xi32>
    %5 = arith.cmpi slt, %3, %4 : vector<1x128xi32>
    %c0_i32 = arith.constant 0 : i32
    %6 = arith.cmpi eq, %arg0, %c0_i32 : i32
    %c0_i32_0 = arith.constant 0 : i32
    %7 = arith.cmpi eq, %arg1, %c0_i32_0 : i32
    %8 = arith.andi %6, %7 : i1
    %9 = arith.extui %8 : i1 to i32
    %c0_i32_1 = arith.constant 0 : i32
    %10 = arith.cmpi ne, %9, %c0_i32_1 : i32
    scf.if %10 {
      %cst_7 = arith.constant 0.000000e+00 : f32
      %20 = vector.broadcast %cst_7 : f32 to vector<4x1xf32>
      %c0 = arith.constant 0 : index
      %c0_8 = arith.constant 0 : index
      %21 = vector.load %arg12[%c0, %c0_8] : memref<4x1xf32, #tpu.memory_space<vmem>>, vector<4x1xf32>
      tpu.vector_store %arg12[%c0, %c0_8], %20 {strides = array<i32>} : memref<4x1xf32, #tpu.memory_space<vmem>>, vector<4x1xf32>,
      %cst_9 = arith.constant 0.000000e+00 : f32
      %22 = vector.broadcast %cst_9 : f32 to vector<4x1xf32>
      %c0_10 = arith.constant 0 : index
      %c0_11 = arith.constant 0 : index
      %23 = vector.load %arg13[%c0_10, %c0_11] : memref<4x1xf32, #tpu.memory_space<vmem>>, vector<4x1xf32>
      tpu.vector_store %arg13[%c0_10, %c0_11], %22 {strides = array<i32>} : memref<4x1xf32, #tpu.memory_space<vmem>>, vector<4x1xf32>,
      %cst_12 = arith.constant 0.000000e+00 : f32
      %24 = vector.broadcast %cst_12 : f32 to vector<10x1xf32>
      %c0_13 = arith.constant 0 : index
      %c0_14 = arith.constant 0 : index
      %25 = vector.load %arg14[%c0_13, %c0_14] : memref<10x1xf32, #tpu.memory_space<vmem>>, vector<10x1xf32>
      tpu.vector_store %arg14[%c0_13, %c0_14], %24 {strides = array<i32>} : memref<10x1xf32, #tpu.memory_space<vmem>>, vector<10x1xf32>,
      %cst_15 = arith.constant 0.000000e+00 : f32
      %26 = vector.broadcast %cst_15 : f32 to vector<10x1xf32>
      %c0_16 = arith.constant 0 : index
      %c0_17 = arith.constant 0 : index
      %27 = vector.load %arg15[%c0_16, %c0_17] : memref<10x1xf32, #tpu.memory_space<vmem>>, vector<10x1xf32>
      tpu.vector_store %arg15[%c0_16, %c0_17], %26 {strides = array<i32>} : memref<10x1xf32, #tpu.memory_space<vmem>>, vector<10x1xf32>,
    } else {
    }
    %c0_i32_2 = arith.constant 0 : i32
    %11 = arith.cmpi eq, %arg0, %c0_i32_2 : i32
    %12 = arith.extui %11 : i1 to i32
    %c0_i32_3 = arith.constant 0 : i32
    %13 = arith.cmpi ne, %12, %c0_i32_3 : i32
    scf.if %13 {
      %c0 = arith.constant 0 : index
      %c0_7 = arith.constant 0 : index
      %20 = vector.load %arg2[%c0, %c0_7] : memref<4x128xf32, #tpu.memory_space<vmem>>, vector<4x128xf32>
      %cst_8 = arith.constant 0.000000e+00 : f32
      %21 = vector.shape_cast %5 : vector<1x128xi1> to vector<1x128xi1>
      %22 = vector.broadcast %21 : vector<1x128xi1> to vector<4x128xi1>
      %23 = vector.broadcast %cst_8 : f32 to vector<4x128xf32>
      %24 = arith.select %22, %20, %23 : vector<4x128xi1>, vector<4x128xf32>
      %c0_9 = arith.constant 0 : index
      %c0_10 = arith.constant 0 : index
      %25 = vector.load %arg12[%c0_9, %c0_10] : memref<4x1xf32, #tpu.memory_space<vmem>>, vector<4x1xf32>
      %cst_11 = arith.constant dense<0.000000e+00> : vector<4xf32>
      %26 = vector.multi_reduction <add>, %24, %cst_11 [1] : vector<4x128xf32> to vector<4xf32>
      %27 = vector.shape_cast %26 : vector<4xf32> to vector<4x1xf32>
      %28 = arith.addf %25, %27 : vector<4x1xf32>
      %c0_12 = arith.constant 0 : index
      %c0_13 = arith.constant 0 : index
      %29 = vector.load %arg12[%c0_12, %c0_13] : memref<4x1xf32, #tpu.memory_space<vmem>>, vector<4x1xf32>
      tpu.vector_store %arg12[%c0_12, %c0_13], %28 {strides = array<i32>} : memref<4x1xf32, #tpu.memory_space<vmem>>, vector<4x1xf32>,
      %c0_14 = arith.constant 0 : index
      %c0_15 = arith.constant 0 : index
      %30 = vector.load %arg13[%c0_14, %c0_15] : memref<4x1xf32, #tpu.memory_space<vmem>>, vector<4x1xf32>
      %31 = arith.mulf %24, %24 : vector<4x128xf32>
      %cst_16 = arith.constant dense<0.000000e+00> : vector<4xf32>
      %32 = vector.multi_reduction <add>, %31, %cst_16 [1] : vector<4x128xf32> to vector<4xf32>
      %33 = vector.shape_cast %32 : vector<4xf32> to vector<4x1xf32>
      %34 = arith.addf %30, %33 : vector<4x1xf32>
      %c0_17 = arith.constant 0 : index
      %c0_18 = arith.constant 0 : index
      %35 = vector.load %arg13[%c0_17, %c0_18] : memref<4x1xf32, #tpu.memory_space<vmem>>, vector<4x1xf32>
      tpu.vector_store %arg13[%c0_17, %c0_18], %34 {strides = array<i32>} : memref<4x1xf32, #tpu.memory_space<vmem>>, vector<4x1xf32>,
    } else {
    }
    %c1_i32 = arith.constant 1 : i32
    %14 = arith.cmpi eq, %arg0, %c1_i32 : i32
    %15 = arith.extui %14 : i1 to i32
    %cst = arith.constant 5.000000e-03 : f32
    %c0_i32_4 = arith.constant 0 : i32
    %16 = arith.cmpi ne, %15, %c0_i32_4 : i32
    scf.if %16 {
      %c0 = arith.constant 0 : index
      %c0_7 = arith.constant 0 : index
      %20 = vector.load %arg12[%c0, %c0_7] : memref<4x1xf32, #tpu.memory_space<vmem>>, vector<4x1xf32>
      %21 = vector.broadcast %cst : f32 to vector<4x1xf32>
      %22 = arith.mulf %20, %21 : vector<4x1xf32>
      %c0_8 = arith.constant 0 : index
      %c0_9 = arith.constant 0 : index
      %23 = vector.load %arg13[%c0_8, %c0_9] : memref<4x1xf32, #tpu.memory_space<vmem>>, vector<4x1xf32>
      %24 = vector.broadcast %cst : f32 to vector<4x1xf32>
      %25 = arith.mulf %23, %24 : vector<4x1xf32>
      %26 = arith.mulf %22, %22 : vector<4x1xf32>
      %27 = arith.subf %25, %26 : vector<4x1xf32>
      %cst_10 = arith.constant 9.99999974E-6 : f32
      %28 = vector.broadcast %cst_10 : f32 to vector<4x1xf32>
      %29 = arith.addf %27, %28 : vector<4x1xf32>
      %30 = math.rsqrt %29 : vector<4x1xf32>
      %c0_11 = arith.constant 0 : index
      %c0_12 = arith.constant 0 : index
      %31 = vector.load %arg3[%c0_11, %c0_12] : memref<4x1xf32, #tpu.memory_space<vmem>>, vector<4x1xf32>
      %32 = arith.mulf %30, %31 : vector<4x1xf32>
      %c0_13 = arith.constant 0 : index
      %c0_14 = arith.constant 0 : index
      %33 = vector.load %arg2[%c0_13, %c0_14] : memref<4x128xf32, #tpu.memory_space<vmem>>, vector<4x128xf32>
      %34 = vector.broadcast %22 : vector<4x1xf32> to vector<4x128xf32>
      %35 = arith.subf %33, %34 : vector<4x128xf32>
      %36 = vector.broadcast %32 : vector<4x1xf32> to vector<4x128xf32>
      %37 = arith.mulf %35, %36 : vector<4x128xf32>
      %c0_15 = arith.constant 0 : index
      %c0_16 = arith.constant 0 : index
      %38 = vector.load %arg4[%c0_15, %c0_16] : memref<4x1xf32, #tpu.memory_space<vmem>>, vector<4x1xf32>
      %39 = vector.broadcast %38 : vector<4x1xf32> to vector<4x128xf32>
      %40 = arith.addf %37, %39 : vector<4x128xf32>
      %c0_17 = arith.constant 0 : index
      %c0_18 = arith.constant 0 : index
      %41 = vector.load %arg5[%c0_17, %c0_18] : memref<10x4xf32, #tpu.memory_space<vmem>>, vector<10x4xf32>
      %cst_19 = arith.constant dense<0.000000e+00> : vector<10x128xf32>
      %42 = tpu.matmul %41, %40, %cst_19 {dimension_numbers = #tpu.dot_dimension_numbers<[1], [0], [0], [1], [0, 0, 1, 1], [], []>} : vector<10x4xf32>, vector<4x128xf32>, vector<10x128xf32> -> vector<10x128xf32>
      %c0_20 = arith.constant 0 : index
      %c0_21 = arith.constant 0 : index
      %43 = vector.load %arg6[%c0_20, %c0_21] : memref<10x1xf32, #tpu.memory_space<vmem>>, vector<10x1xf32>
      %44 = vector.broadcast %43 : vector<10x1xf32> to vector<10x128xf32>
      %45 = arith.addf %42, %44 : vector<10x128xf32>
      %cst_22 = arith.constant 0.000000e+00 : f32
      %46 = vector.broadcast %cst_22 : f32 to vector<10x128xf32>
      %47 = arith.cmpf ogt, %45, %46 : vector<10x128xf32>
      %cst_23 = arith.constant 5.000000e-01 : f32
      %48 = vector.broadcast %cst_23 : f32 to vector<10x128xf32>
      %49 = arith.mulf %48, %45 : vector<10x128xf32>
      %50 = arith.select %47, %45, %49 : vector<10x128xi1>, vector<10x128xf32>
      %51 = arith.index_cast %arg1 : i32 to index
      %c0_24 = arith.constant 0 : index
      %c0_25 = arith.constant 0 : index
      %52 = vector.load %arg16[%51, %c0_24, %c0_25] : memref<2x10x128xf32, #tpu.memory_space<vmem>>, vector<1x10x128xf32>
      %53 = vector.shape_cast %52 : vector<1x10x128xf32> to vector<10x128xf32>
      %54 = vector.shape_cast %50 : vector<10x128xf32> to vector<1x10x128xf32>
      tpu.vector_store %arg16[%51, %c0_24, %c0_25], %54 {strides = array<i32>} : memref<2x10x128xf32, #tpu.memory_space<vmem>>, vector<1x10x128xf32>,
      %cst_26 = arith.constant 0.000000e+00 : f32
      %55 = vector.shape_cast %5 : vector<1x128xi1> to vector<1x128xi1>
      %56 = vector.broadcast %55 : vector<1x128xi1> to vector<10x128xi1>
      %57 = vector.broadcast %cst_26 : f32 to vector<10x128xf32>
      %58 = arith.select %56, %50, %57 : vector<10x128xi1>, vector<10x128xf32>
      %c0_27 = arith.constant 0 : index
      %c0_28 = arith.constant 0 : index
      %59 = vector.load %arg14[%c0_27, %c0_28] : memref<10x1xf32, #tpu.memory_space<vmem>>, vector<10x1xf32>
      %cst_29 = arith.constant dense<0.000000e+00> : vector<10xf32>
      %60 = vector.multi_reduction <add>, %58, %cst_29 [1] : vector<10x128xf32> to vector<10xf32>
      %61 = vector.shape_cast %60 : vector<10xf32> to vector<10x1xf32>
      %62 = arith.addf %59, %61 : vector<10x1xf32>
      %c0_30 = arith.constant 0 : index
      %c0_31 = arith.constant 0 : index
      %63 = vector.load %arg14[%c0_30, %c0_31] : memref<10x1xf32, #tpu.memory_space<vmem>>, vector<10x1xf32>
      tpu.vector_store %arg14[%c0_30, %c0_31], %62 {strides = array<i32>} : memref<10x1xf32, #tpu.memory_space<vmem>>, vector<10x1xf32>,
      %c0_32 = arith.constant 0 : index
      %c0_33 = arith.constant 0 : index
      %64 = vector.load %arg15[%c0_32, %c0_33] : memref<10x1xf32, #tpu.memory_space<vmem>>, vector<10x1xf32>
      %65 = arith.mulf %58, %58 : vector<10x128xf32>
      %cst_34 = arith.constant dense<0.000000e+00> : vector<10xf32>
      %66 = vector.multi_reduction <add>, %65, %cst_34 [1] : vector<10x128xf32> to vector<10xf32>
      %67 = vector.shape_cast %66 : vector<10xf32> to vector<10x1xf32>
      %68 = arith.addf %64, %67 : vector<10x1xf32>
      %c0_35 = arith.constant 0 : index
      %c0_36 = arith.constant 0 : index
      %69 = vector.load %arg15[%c0_35, %c0_36] : memref<10x1xf32, #tpu.memory_space<vmem>>, vector<10x1xf32>
      tpu.vector_store %arg15[%c0_35, %c0_36], %68 {strides = array<i32>} : memref<10x1xf32, #tpu.memory_space<vmem>>, vector<10x1xf32>,
    } else {
    }
    %c2_i32 = arith.constant 2 : i32
    %17 = arith.cmpi eq, %arg0, %c2_i32 : i32
    %18 = arith.extui %17 : i1 to i32
    %cst_5 = arith.constant 5.000000e-03 : f32
    %c0_i32_6 = arith.constant 0 : i32
    %19 = arith.cmpi ne, %18, %c0_i32_6 : i32
    scf.if %19 {
      %c0 = arith.constant 0 : index
      %c0_7 = arith.constant 0 : index
      %20 = vector.load %arg14[%c0, %c0_7] : memref<10x1xf32, #tpu.memory_space<vmem>>, vector<10x1xf32>
      %21 = vector.broadcast %cst_5 : f32 to vector<10x1xf32>
      %22 = arith.mulf %20, %21 : vector<10x1xf32>
      %c0_8 = arith.constant 0 : index
      %c0_9 = arith.constant 0 : index
      %23 = vector.load %arg15[%c0_8, %c0_9] : memref<10x1xf32, #tpu.memory_space<vmem>>, vector<10x1xf32>
      %24 = vector.broadcast %cst_5 : f32 to vector<10x1xf32>
      %25 = arith.mulf %23, %24 : vector<10x1xf32>
      %26 = arith.mulf %22, %22 : vector<10x1xf32>
      %27 = arith.subf %25, %26 : vector<10x1xf32>
      %cst_10 = arith.constant 9.99999974E-6 : f32
      %28 = vector.broadcast %cst_10 : f32 to vector<10x1xf32>
      %29 = arith.addf %27, %28 : vector<10x1xf32>
      %30 = math.rsqrt %29 : vector<10x1xf32>
      %c0_11 = arith.constant 0 : index
      %c0_12 = arith.constant 0 : index
      %31 = vector.load %arg7[%c0_11, %c0_12] : memref<10x1xf32, #tpu.memory_space<vmem>>, vector<10x1xf32>
      %32 = arith.mulf %30, %31 : vector<10x1xf32>
      %33 = arith.index_cast %arg1 : i32 to index
      %c0_13 = arith.constant 0 : index
      %c0_14 = arith.constant 0 : index
      %34 = vector.load %arg16[%33, %c0_13, %c0_14] : memref<2x10x128xf32, #tpu.memory_space<vmem>>, vector<1x10x128xf32>
      %35 = vector.shape_cast %34 : vector<1x10x128xf32> to vector<10x128xf32>
      %36 = vector.broadcast %22 : vector<10x1xf32> to vector<10x128xf32>
      %37 = arith.subf %35, %36 : vector<10x128xf32>
      %38 = vector.broadcast %32 : vector<10x1xf32> to vector<10x128xf32>
      %39 = arith.mulf %37, %38 : vector<10x128xf32>
      %c0_15 = arith.constant 0 : index
      %c0_16 = arith.constant 0 : index
      %40 = vector.load %arg8[%c0_15, %c0_16] : memref<10x1xf32, #tpu.memory_space<vmem>>, vector<10x1xf32>
      %41 = vector.broadcast %40 : vector<10x1xf32> to vector<10x128xf32>
      %42 = arith.addf %39, %41 : vector<10x128xf32>
      %c0_17 = arith.constant 0 : index
      %c0_18 = arith.constant 0 : index
      %43 = vector.load %arg9[%c0_17, %c0_18] : memref<10x1xf32, #tpu.memory_space<vmem>>, vector<10x1xf32>
      %44 = vector.broadcast %43 : vector<10x1xf32> to vector<10x128xf32>
      %45 = arith.mulf %42, %44 : vector<10x128xf32>
      %cst_19 = arith.constant dense<0.000000e+00> : vector<128xf32>
      %46 = vector.multi_reduction <add>, %45, %cst_19 [0] : vector<10x128xf32> to vector<128xf32>
      %47 = vector.shape_cast %46 : vector<128xf32> to vector<1x128xf32>
      %c0_20 = arith.constant 0 : index
      %c0_21 = arith.constant 0 : index
      %48 = vector.load %arg10[%c0_20, %c0_21] : memref<1x1xf32, #tpu.memory_space<vmem>>, vector<1x1xf32>
      %49 = vector.broadcast %48 : vector<1x1xf32> to vector<1x128xf32>
      %50 = arith.addf %47, %49 : vector<1x128xf32>
      %51 = arith.negf %50 : vector<1x128xf32>
      %52 = math.exp %51 : vector<1x128xf32>
      %cst_22 = arith.constant 1.000000e+00 : f32
      %53 = vector.broadcast %cst_22 : f32 to vector<1x128xf32>
      %54 = arith.addf %53, %52 : vector<1x128xf32>
      %55 = arith.divf %53, %54 : vector<1x128xf32>
      %c0_23 = arith.constant 0 : index
      %c0_24 = arith.constant 0 : index
      %56 = vector.load %arg11[%c0_23, %c0_24] : memref<1x128xf32, #tpu.memory_space<vmem>>, vector<1x128xf32>
      tpu.vector_store %arg11[%c0_23, %c0_24], %55 {strides = array<i32>} : memref<1x128xf32, #tpu.memory_space<vmem>>, vector<1x128xf32>,
    } else {
    }
    return
  }
  func.func @transform_0(%arg0: i32, %arg1: i32) -> (i32, i32) {
    %c0_i32 = arith.constant 0 : i32
    %c0_i32_0 = arith.constant 0 : i32
    return %c0_i32, %arg1 : i32, i32
  }
  func.func @transform_1(%arg0: i32, %arg1: i32) -> (i32, i32) {
    %c0_i32 = arith.constant 0 : i32
    %c0_i32_0 = arith.constant 0 : i32
    %c0_i32_1 = arith.constant 0 : i32
    return %c0_i32, %c0_i32_0 : i32, i32
  }
  func.func @transform_2(%arg0: i32, %arg1: i32) -> (i32, i32) {
    %c0_i32 = arith.constant 0 : i32
    %c0_i32_0 = arith.constant 0 : i32
    %c0_i32_1 = arith.constant 0 : i32
    return %c0_i32, %c0_i32_0 : i32, i32
  }
  func.func @transform_3(%arg0: i32, %arg1: i32) -> (i32, i32) {
    %c0_i32 = arith.constant 0 : i32
    %c0_i32_0 = arith.constant 0 : i32
    %c0_i32_1 = arith.constant 0 : i32
    return %c0_i32, %c0_i32_0 : i32, i32
  }
  func.func @transform_4(%arg0: i32, %arg1: i32) -> (i32, i32) {
    %c0_i32 = arith.constant 0 : i32
    %c0_i32_0 = arith.constant 0 : i32
    %c0_i32_1 = arith.constant 0 : i32
    return %c0_i32, %c0_i32_0 : i32, i32
  }
  func.func @transform_5(%arg0: i32, %arg1: i32) -> (i32, i32) {
    %c0_i32 = arith.constant 0 : i32
    %c0_i32_0 = arith.constant 0 : i32
    %c0_i32_1 = arith.constant 0 : i32
    return %c0_i32, %c0_i32_0 : i32, i32
  }
  func.func @transform_6(%arg0: i32, %arg1: i32) -> (i32, i32) {
    %c0_i32 = arith.constant 0 : i32
    %c0_i32_0 = arith.constant 0 : i32
    %c0_i32_1 = arith.constant 0 : i32
    return %c0_i32, %c0_i32_0 : i32, i32
  }
  func.func @transform_7(%arg0: i32, %arg1: i32) -> (i32, i32) {
    %c0_i32 = arith.constant 0 : i32
    %c0_i32_0 = arith.constant 0 : i32
    %c0_i32_1 = arith.constant 0 : i32
    return %c0_i32, %c0_i32_0 : i32, i32
  }
  func.func @transform_8(%arg0: i32, %arg1: i32) -> (i32, i32) {
    %c0_i32 = arith.constant 0 : i32
    %c0_i32_0 = arith.constant 0 : i32
    %c0_i32_1 = arith.constant 0 : i32
    return %c0_i32, %c0_i32_0 : i32, i32
  }
  func.func @transform_9(%arg0: i32, %arg1: i32) -> (i32, i32) {
    %c0_i32 = arith.constant 0 : i32
    %c0_i32_0 = arith.constant 0 : i32
    return %c0_i32, %arg1 : i32, i32
  }
}

</mosaic_0001>

<llo_original>
// kernel: tpu_custom_call.1
$region0: #{tpu_custom_call.1}
  #allocation0 [shape = 'u32[]', space=smem, size = 0x4, offset = 0x4, fixed_abs, tag = 'smem constant byte address 0x4 - core index']
  #allocation1 [shape = 'u32[72,128]{1,0:T(1,128)}', space=vmem, size = 0x9000, scoped, tag = 'internal scratch']
  #allocation2 [shape = 'f32[4,1]{1,0:T(4,128)}', space=vmem, size = 0x800, scoped, tag = 'scratch operand']
  #allocation3 [shape = 'f32[4,1]{1,0:T(4,128)}', space=vmem, size = 0x800, scoped, tag = 'scratch operand']
  #allocation4 [shape = 'f32[10,1]{1,0:T(8,128)}', space=vmem, size = 0x2000, scoped, tag = 'scratch operand']
  #allocation5 [shape = 'f32[10,1]{1,0:T(8,128)}', space=vmem, size = 0x2000, scoped, tag = 'scratch operand']
  #allocation6 [shape = 'f32[2,10,128]{2,1,0:T(8,128)}', space=vmem, size = 0x4000, scoped, tag = 'scratch operand']
  #allocation7 [shape = 'f32[1,1]{1,0:T(1,128)S(1)}', space=vmem, size = 0x200, scoped, tag = 'scoped memory for tpu_custom_call.1']
  %s0 = inlined_call_operand.vmem [shape: f32[4,256], index: 0, kind: input, shape index: {}]
  %s1 = inlined_call_operand.vmem [shape: f32[4,1], index: 1, kind: input, shape index: {}]
  %s2 = inlined_call_operand.vmem [shape: f32[4,1], index: 2, kind: input, shape index: {}]
  %s3 = inlined_call_operand.vmem [shape: f32[10,4], index: 3, kind: input, shape index: {}]
  %s4 = inlined_call_operand.vmem [shape: f32[10,1], index: 4, kind: input, shape index: {}]
  %s5 = inlined_call_operand.vmem [shape: f32[10,1], index: 5, kind: input, shape index: {}]
  %s6 = inlined_call_operand.vmem [shape: f32[10,1], index: 6, kind: input, shape index: {}]
  %s7 = inlined_call_operand.vmem [shape: f32[10,1], index: 7, kind: input, shape index: {}]
  %s8 = inlined_call_operand.<no memory space> [shape: f32[1,1], index: 8, kind: input, shape index: {}]
  %s9 = inlined_call_operand.hbm [shape: f32[1,256], index: 9, kind: output, shape index: {}]
  %s10 = sld [smem:[#allocation0]]
  $region85: #{tpu_custom_call.1} parent=0
    _
  %s12 = ssub.s32 1, %s10
  %s13 = scalar_select 0, %s12, %s10
  %v14 = vstv %s8
  %15 = vst [vmem:[#allocation7] sm:$0x1] %v14
  $region1: #{tpu_custom_call.1} parent=0
    #allocation8 [shape = 'u8[1024]{0}', space=vmem, size = 0x400, scoped, tag = 'output window, operand 0']
    #allocation9 [shape = 's32[2]{0}', space=sflag, size = 0x8, scoped, tag = 'scoped memory for tpu_custom_call.1']
    %16 = vsyncpa [#allocation9], 0
    %s17 = scalar_lea.sflag [#allocation9], 1
    %18 = vsyncpa %s17, 0
    loop: start=0, step=1, limit=8
    $region2: #{tpu_custom_call.1} parent=1 // loop_pre_header
      _
    $region3: #{tpu_custom_call.1} parent=1 // loop_header
      %s20 = sphi 0, %s24
      %p21 = scmp.ge.s32.totalorder %s20, 8
      %s27 = sphi 0, %s39
      %s28 = sphi 0, %s35
      %s29 = sphi 0, %s27
      %s30 = sphi 0, %s28
      %s31 = sphi 0, %s29
      %s32 = sphi 0, %s30
      %s42 = sphi 0, %s44
      %s45 = sphi 0, %s42
      %s46 = sphi 0, %s45
      %s62 = sphi 0, %s46
      %s66 = sphi 0, %s66
      %s68 = sphi 0, %s66
      %s69 = sphi 0, %s68
      %s83 = sphi 0, %s69
      %s87 = sphi 0, %s87
      %s89 = sphi 0, %s87
      %s90 = sphi 0, %s89
      %s104 = sphi 0, %s90
      %s108 = sphi 0, %s108
      %s110 = sphi 0, %s108
      %s111 = sphi 0, %s110
      %s125 = sphi 0, %s111
      %s129 = sphi 0, %s129
      %s131 = sphi 0, %s129
      %s132 = sphi 0, %s131
      %s146 = sphi 0, %s132
      %s150 = sphi 0, %s150
      %s152 = sphi 0, %s150
      %s153 = sphi 0, %s152
      %s167 = sphi 0, %s153
      %s171 = sphi 0, %s171
      %s173 = sphi 0, %s171
      %s174 = sphi 0, %s173
      %s188 = sphi 0, %s174
      %s192 = sphi 0, %s192
      %s194 = sphi 0, %s192
      %s195 = sphi 0, %s194
      %s209 = sphi 0, %s195
      %s213 = sphi 0, %s213
      %s215 = sphi 0, %s213
      %s216 = sphi 0, %s215
      %s230 = sphi 0, %s216
      %s236 = sphi 0, %s238
      %s239 = sphi 0, %s236
      %s240 = sphi 0, %s239
      %s256 = sphi 0, %s240
    $region4: #{tpu_custom_call.1} parent=1 // loop_header_branch
      %23 = sbr.rel (%p21) target = $region8
    $region5: #{tpu_custom_call.1} parent=1 // loop_body
      %s25 = ssub.s32 %s20, 1
      %s26 = ssub.s32 %s20, 2
      %s33 = sadd.s32 1, %s28
      %p34 = scmp.ge.s32.totalorder %s33, 2
      %s35 = scalar_select %p34, 0, %s33
      %s36 = sadd.s32 1, %s27
      %s37 = scalar_select %p34, %s36, %s27
      %p38 = scmp.ge.s32.totalorder %s37, 3
      %s39 = scalar_select %p38, 0, %s37
      %s40 = ssub.s32 %s28, %s35
      %p41 = scmp.eq.s32.totalorder %s40, 0
      %s43 = sadd.s32 %s42, 1
      %s44 = scalar_select %p41, %s42, %s43
      %p47 = pneg %p41
      %p48 = scmp.eq.s32.totalorder %s20, 5
      %p49 = por %p47, %p48
      %p50 = scmp.ne.s32.totalorder %s42, %s45
      %p51 = scmp.eq.s32.totalorder %s20, 0
      %p52 = por %p50, %p51
      %p53 = scmp.ne.s32.totalorder %s42, %s45
      %p54 = scmp.eq.s32.totalorder %s25, 5
      %p55 = por %p53, %p54
      %p56 = scmp.ne.s32.totalorder %s45, %s46
      %p57 = scmp.eq.s32.totalorder %s25, 0
      %p58 = por %p56, %p57
      %p59 = scmp.ne.s32.totalorder %s45, %s46
      %p60 = scmp.eq.s32.totalorder %s26, 5
      %p61 = por %p59, %p60
      %p63 = scmp.ne.s32.totalorder %s46, %s62
      %p64 = scmp.eq.s32.totalorder %s26, 0
      %p65 = por %p63, %p64
      %s67 = sadd.s32 %s66, 1
      %p70 = scmp.eq.s32.totalorder %s20, 5
      %p71 = scmp.ne.s32.totalorder %s66, %s68
      %p72 = scmp.eq.s32.totalorder %s20, 0
      %p73 = por %p71, %p72
      %p74 = scmp.ne.s32.totalorder %s66, %s68
      %p75 = scmp.eq.s32.totalorder %s25, 5
      %p76 = por %p74, %p75
      %p77 = scmp.ne.s32.totalorder %s68, %s69
      %p78 = scmp.eq.s32.totalorder %s25, 0
      %p79 = por %p77, %p78
      %p80 = scmp.ne.s32.totalorder %s68, %s69
      %p81 = scmp.eq.s32.totalorder %s26, 5
      %p82 = por %p80, %p81
      %p84 = scmp.ne.s32.totalorder %s69, %s83
      %p85 = scmp.eq.s32.totalorder %s26, 0
      %p86 = por %p84, %p85
      %s88 = sadd.s32 %s87, 1
      %p91 = scmp.eq.s32.totalorder %s20, 5
      %p92 = scmp.ne.s32.totalorder %s87, %s89
      %p93 = scmp.eq.s32.totalorder %s20, 0
      %p94 = por %p92, %p93
      %p95 = scmp.ne.s32.totalorder %s87, %s89
      %p96 = scmp.eq.s32.totalorder %s25, 5
      %p97 = por %p95, %p96
      %p98 = scmp.ne.s32.totalorder %s89, %s90
      %p99 = scmp.eq.s32.totalorder %s25, 0
      %p100 = por %p98, %p99
      %p101 = scmp.ne.s32.totalorder %s89, %s90
      %p102 = scmp.eq.s32.totalorder %s26, 5
      %p103 = por %p101, %p102
      %p105 = scmp.ne.s32.totalorder %s90, %s104
      %p106 = scmp.eq.s32.totalorder %s26, 0
      %p107 = por %p105, %p106
      %s109 = sadd.s32 %s108, 1
      %p112 = scmp.eq.s32.totalorder %s20, 5
      %p113 = scmp.ne.s32.totalorder %s108, %s110
      %p114 = scmp.eq.s32.totalorder %s20, 0
      %p115 = por %p113, %p114
      %p116 = scmp.ne.s32.totalorder %s108, %s110
      %p117 = scmp.eq.s32.totalorder %s25, 5
      %p118 = por %p116, %p117
      %p119 = scmp.ne.s32.totalorder %s110, %s111
      %p120 = scmp.eq.s32.totalorder %s25, 0
      %p121 = por %p119, %p120
      %p122 = scmp.ne.s32.totalorder %s110, %s111
      %p123 = scmp.eq.s32.totalorder %s26, 5
      %p124 = por %p122, %p123
      %p126 = scmp.ne.s32.totalorder %s111, %s125
      %p127 = scmp.eq.s32.totalorder %s26, 0
      %p128 = por %p126, %p127
      %s130 = sadd.s32 %s129, 1
      %p133 = scmp.eq.s32.totalorder %s20, 5
      %p134 = scmp.ne.s32.totalorder %s129, %s131
      %p135 = scmp.eq.s32.totalorder %s20, 0
      %p136 = por %p134, %p135
      %p137 = scmp.ne.s32.totalorder %s129, %s131
      %p138 = scmp.eq.s32.totalorder %s25, 5
      %p139 = por %p137, %p138
      %p140 = scmp.ne.s32.totalorder %s131, %s132
      %p141 = scmp.eq.s32.totalorder %s25, 0
      %p142 = por %p140, %p141
      %p143 = scmp.ne.s32.totalorder %s131, %s132
      %p144 = scmp.eq.s32.totalorder %s26, 5
      %p145 = por %p143, %p144
      %p147 = scmp.ne.s32.totalorder %s132, %s146
      %p148 = scmp.eq.s32.totalorder %s26, 0
      %p149 = por %p147, %p148
      %s151 = sadd.s32 %s150, 1
      %p154 = scmp.eq.s32.totalorder %s20, 5
      %p155 = scmp.ne.s32.totalorder %s150, %s152
      %p156 = scmp.eq.s32.totalorder %s20, 0
      %p157 = por %p155, %p156
      %p158 = scmp.ne.s32.totalorder %s150, %s152
      %p159 = scmp.eq.s32.totalorder %s25, 5
      %p160 = por %p158, %p159
      %p161 = scmp.ne.s32.totalorder %s152, %s153
      %p162 = scmp.eq.s32.totalorder %s25, 0
      %p163 = por %p161, %p162
      %p164 = scmp.ne.s32.totalorder %s152, %s153
      %p165 = scmp.eq.s32.totalorder %s26, 5
      %p166 = por %p164, %p165
      %p168 = scmp.ne.s32.totalorder %s153, %s167
      %p169 = scmp.eq.s32.totalorder %s26, 0
      %p170 = por %p168, %p169
      %s172 = sadd.s32 %s171, 1
      %p175 = scmp.eq.s32.totalorder %s20, 5
      %p176 = scmp.ne.s32.totalorder %s171, %s173
      %p177 = scmp.eq.s32.totalorder %s20, 0
      %p178 = por %p176, %p177
      %p179 = scmp.ne.s32.totalorder %s171, %s173
      %p180 = scmp.eq.s32.totalorder %s25, 5
      %p181 = por %p179, %p180
      %p182 = scmp.ne.s32.totalorder %s173, %s174
      %p183 = scmp.eq.s32.totalorder %s25, 0
      %p184 = por %p182, %p183
      %p185 = scmp.ne.s32.totalorder %s173, %s174
      %p186 = scmp.eq.s32.totalorder %s26, 5
      %p187 = por %p185, %p186
      %p189 = scmp.ne.s32.totalorder %s174, %s188
      %p190 = scmp.eq.s32.totalorder %s26, 0
      %p191 = por %p189, %p190
      %s193 = sadd.s32 %s192, 1
      %p196 = scmp.eq.s32.totalorder %s20, 5
      %p197 = scmp.ne.s32.totalorder %s192, %s194
      %p198 = scmp.eq.s32.totalorder %s20, 0
      %p199 = por %p197, %p198
      %p200 = scmp.ne.s32.totalorder %s192, %s194
      %p201 = scmp.eq.s32.totalorder %s25, 5
      %p202 = por %p200, %p201
      %p203 = scmp.ne.s32.totalorder %s194, %s195
      %p204 = scmp.eq.s32.totalorder %s25, 0
      %p205 = por %p203, %p204
      %p206 = scmp.ne.s32.totalorder %s194, %s195
      %p207 = scmp.eq.s32.totalorder %s26, 5
      %p208 = por %p206, %p207
      %p210 = scmp.ne.s32.totalorder %s195, %s209
      %p211 = scmp.eq.s32.totalorder %s26, 0
      %p212 = por %p210, %p211
      %s214 = sadd.s32 %s213, 1
      %p217 = scmp.eq.s32.totalorder %s20, 5
      %p218 = scmp.ne.s32.totalorder %s213, %s215
      %p219 = scmp.eq.s32.totalorder %s20, 0
      %p220 = por %p218, %p219
      %p221 = scmp.ne.s32.totalorder %s213, %s215
      %p222 = scmp.eq.s32.totalorder %s25, 5
      %p223 = por %p221, %p222
      %p224 = scmp.ne.s32.totalorder %s215, %s216
      %p225 = scmp.eq.s32.totalorder %s25, 0
      %p226 = por %p224, %p225
      %p227 = scmp.ne.s32.totalorder %s215, %s216
      %p228 = scmp.eq.s32.totalorder %s26, 5
      %p229 = por %p227, %p228
      %p231 = scmp.ne.s32.totalorder %s216, %s230
      %p232 = scmp.eq.s32.totalorder %s26, 0
      %p233 = por %p231, %p232
      %s234 = ssub.s32 %s28, %s35
      %p235 = scmp.eq.s32.totalorder %s234, 0
      %s237 = sadd.s32 %s236, 1
      %s238 = scalar_select %p235, %s236, %s237
      %p241 = pneg %p235
      %p242 = scmp.eq.s32.totalorder %s20, 5
      %p243 = por %p241, %p242
      %p244 = scmp.ne.s32.totalorder %s236, %s239
      %p245 = scmp.eq.s32.totalorder %s20, 0
      %p246 = por %p244, %p245
      %p247 = scmp.ne.s32.totalorder %s236, %s239
      %p248 = scmp.eq.s32.totalorder %s25, 5
      %p249 = por %p247, %p248
      %p250 = scmp.ne.s32.totalorder %s239, %s240
      %p251 = scmp.eq.s32.totalorder %s25, 0
      %p252 = por %p250, %p251
      %p253 = scmp.ne.s32.totalorder %s239, %s240
      %p254 = scmp.eq.s32.totalorder %s26, 5
      %p255 = por %p253, %p254
      %p257 = scmp.ne.s32.totalorder %s240, %s256
      %p258 = scmp.eq.s32.totalorder %s26, 0
      %p259 = por %p257, %p258
      %p260 = scmp.le.s32.totalorder 1, %s20
      %p261 = scmp.lt.s32.totalorder %s20, 7
      %p262 = pnand %p260, %p261
      %p263 = pneg %p262
      // Predicated region
      $region9: #{tpu_custom_call.1} parent=5 // pred_check
        _
      $region10: #{tpu_custom_call.1} parent=5 // pred_check_branch
        %265 = sbr.rel (%p262) target = $region12
      $region11: #{tpu_custom_call.1} parent=5 // pred_region
        %s266 = ssub.s32 %s20, 1
        // Predicated region
        $region13: #{tpu_custom_call.1} parent=11 // pred_check
          %p267 = pneg %p79
        $region14: #{tpu_custom_call.1} parent=11 // pred_check_branch
          %269 = sbr.rel (%p267) target = $region16
        $region15: #{tpu_custom_call.1} parent=11 // pred_region
          _
        $region16: #{tpu_custom_call.1} parent=11 // pred_fallthru
          _
        // Predicated region
        $region17: #{tpu_custom_call.1} parent=11 // pred_check
          %p270 = pneg %p100
        $region18: #{tpu_custom_call.1} parent=11 // pred_check_branch
          %272 = sbr.rel (%p270) target = $region20
        $region19: #{tpu_custom_call.1} parent=11 // pred_region
          _
        $region20: #{tpu_custom_call.1} parent=11 // pred_fallthru
          _
        // Predicated region
        $region21: #{tpu_custom_call.1} parent=11 // pred_check
          %p273 = pneg %p121
        $region22: #{tpu_custom_call.1} parent=11 // pred_check_branch
          %275 = sbr.rel (%p273) target = $region24
        $region23: #{tpu_custom_call.1} parent=11 // pred_region
          _
        $region24: #{tpu_custom_call.1} parent=11 // pred_fallthru
          _
        // Predicated region
        $region25: #{tpu_custom_call.1} parent=11 // pred_check
          %p276 = pneg %p142
        $region26: #{tpu_custom_call.1} parent=11 // pred_check_branch
          %278 = sbr.rel (%p276) target = $region28
        $region27: #{tpu_custom_call.1} parent=11 // pred_region
          _
        $region28: #{tpu_custom_call.1} parent=11 // pred_fallthru
          _
        // Predicated region
        $region29: #{tpu_custom_call.1} parent=11 // pred_check
          %p279 = pneg %p163
        $region30: #{tpu_custom_call.1} parent=11 // pred_check_branch
          %281 = sbr.rel (%p279) target = $region32
        $region31: #{tpu_custom_call.1} parent=11 // pred_region
          _
        $region32: #{tpu_custom_call.1} parent=11 // pred_fallthru
          _
        // Predicated region
        $region33: #{tpu_custom_call.1} parent=11 // pred_check
          %p282 = pneg %p184
        $region34: #{tpu_custom_call.1} parent=11 // pred_check_branch
          %284 = sbr.rel (%p282) target = $region36
        $region35: #{tpu_custom_call.1} parent=11 // pred_region
          _
        $region36: #{tpu_custom_call.1} parent=11 // pred_fallthru
          _
        // Predicated region
        $region37: #{tpu_custom_call.1} parent=11 // pred_check
          %p285 = pneg %p205
        $region38: #{tpu_custom_call.1} parent=11 // pred_check_branch
          %287 = sbr.rel (%p285) target = $region40
        $region39: #{tpu_custom_call.1} parent=11 // pred_region
          _
        $region40: #{tpu_custom_call.1} parent=11 // pred_fallthru
          _
        // Predicated region
        $region41: #{tpu_custom_call.1} parent=11 // pred_check
          %p288 = pneg %p226
        $region42: #{tpu_custom_call.1} parent=11 // pred_check_branch
          %290 = sbr.rel (%p288) target = $region44
        $region43: #{tpu_custom_call.1} parent=11 // pred_region
          _
        $region44: #{tpu_custom_call.1} parent=11 // pred_fallthru
          _
      $region12: #{tpu_custom_call.1} parent=5 // pred_fallthru
        _
      %p291 = scmp.lt.s32.totalorder %s20, 6
      // Predicated region
      $region45: #{tpu_custom_call.1} parent=5 // pred_check
        %p292 = pneg %p291
      $region46: #{tpu_custom_call.1} parent=5 // pred_check_branch
        %294 = sbr.rel (%p292) target = $region48
      $region47: #{tpu_custom_call.1} parent=5 // pred_region
        // Predicated region
        $region49: #{tpu_custom_call.1} parent=47 // pred_check
          %p295 = pneg %p52
        $region50: #{tpu_custom_call.1} parent=47 // pred_check_branch
          %297 = sbr.rel (%p295) target = $region52
        $region51: #{tpu_custom_call.1} parent=47 // pred_region
          %p298 = scmp.lt.s32.totalorder %s28, 1
          %s299 = scalar_select %p298, %s28, 1
          %s300 = smul.addr %s299, 4
          %s301 = scalar_lea.vmem %s0, %s300
        $region52: #{tpu_custom_call.1} parent=47 // pred_fallthru
          _
      $region48: #{tpu_custom_call.1} parent=5 // pred_fallthru
        _
      %p302 = scmp.le.s32.totalorder 1, %s20
      %p303 = scmp.lt.s32.totalorder %s20, 7
      %p304 = pnand %p302, %p303
      %p305 = pneg %p304
      // Predicated region
      $region53: #{tpu_custom_call.1} parent=5 // pred_check
        _
      $region54: #{tpu_custom_call.1} parent=5 // pred_check_branch
        %307 = sbr.rel (%p304) target = $region56
      $region55: #{tpu_custom_call.1} parent=5 // pred_region
        %s308 = ssub.s32 %s20, 1
        %p309 = scmp.lt.s32.totalorder %s30, 1
        %s310 = scalar_select %p309, %s30, 1
        %s311 = smul.addr %s310, 4
        %s312 = scalar_lea.vmem %s0, %s311
        %p313 = pneg %p58
        %p314 = pneg %p55
        %p315 = pneg %p79
        %p316 = pneg %p76
        %p317 = pneg %p100
        %p318 = pneg %p97
        %p319 = pneg %p121
        %p320 = pneg %p118
        %p321 = pneg %p142
        %p322 = pneg %p139
        %p323 = pneg %p163
        %p324 = pneg %p160
        %p325 = pneg %p184
        %p326 = pneg %p181
        %p327 = pneg %p205
        %p328 = pneg %p202
        %p329 = pneg %p226
        %p330 = pneg %p223
        %p331 = pneg %p252
        %p332 = pneg %p249
        %s333 = sand.u32 %s239, 1
        %s334 = scalar_lea.sflag [#allocation9], %s333
        %s335 = sand.u32 %s239, 1
        %s336 = scalar_lea.vmem [#allocation8], %s335
        %p337 = scmp.lt.s32.totalorder %s30, 1
        %s338 = scalar_select %p337, %s30, 1
        %s339 = smul.addr %s338, 4
        %s340 = scalar_lea.vmem %s0, %s339
        %s341 = smul.u32 %s30, 128
        %v342 = vlaneseq
        %v343 = vand.u32 %v342, 127
        %v344 = vstv %s341
        %v345 = vadd.s32 %v344, %v343
        %vm346 = vcmp.lt.s32.totalorder %v345, 200
        %p347 = scmp.eq.s32.totalorder %s29, 0
        %p348 = scmp.eq.s32.totalorder %s30, 0
        %p349 = pnand %p347, %p348
        %p350 = pneg %p349
        // Predicated region
        $region57: #{tpu_custom_call.1} parent=55 // pred_check
          _
        $region58: #{tpu_custom_call.1} parent=55 // pred_check_branch
          %352 = sbr.rel (%p349) target = $region60
        $region59: #{tpu_custom_call.1} parent=55 // pred_region
          %vm353 = vcmask 3072
          %354 = vst.msk [vmem:[#allocation2] sm:$0xf] %vm353, 0.0
          %355 = vst.msk [vmem:[#allocation3] sm:$0xf] %vm353, 0.0
          %vm356 = vcmask 7168
          %357 = vst.msk [vmem:[#allocation4] sm:$0xff] %vm356, 0.0
          %vm358 = vcmask 1024
          %359 = vst.msk [vmem:[#allocation4 + $0x8] sm:$0x3] %vm358, 0.0
          %360 = vst.msk [vmem:[#allocation5] sm:$0xff] %vm356, 0.0
          %361 = vst.msk [vmem:[#allocation5 + $0x8] sm:$0x3] %vm358, 0.0
        $region60: #{tpu_custom_call.1} parent=55 // pred_fallthru
          _
        // Predicated region
        $region61: #{tpu_custom_call.1} parent=55 // pred_check
          %p362 = pneg %p347
        $region62: #{tpu_custom_call.1} parent=55 // pred_check_branch
          %364 = sbr.rel (%p362) target = $region64
        $region63: #{tpu_custom_call.1} parent=55 // pred_region
          %v365 = vld [vmem:[%s340] sm:$0xf]
          %v366 = vsel %vm346, 1, 0
          %vm367 = vcmp.eq.s32.totalorder %v366, 1
          %v368 = vsel %vm367, %v365, 0.0
          %v369 = vld [vmem:[#allocation2] sm:$0xf]
          %vm370 = vcmask 1043456
          %v371 = vsel %vm370, %v368, 0.0
          %372 = vadd.xlane.f32.xlu0 %v371
          %v373 = vpop.xlane.xlu0 %372
          %v374 = vadd.f32 %v369, %v373
          %vm375 = vcmask 3072
          %376 = vst.msk [vmem:[#allocation2] sm:$0xf] %vm375, %v374
          %v377 = vld [vmem:[#allocation3] sm:$0xf]
          %v378 = vmul.f32 %v368, %v368
          %v379 = vsel %vm370, %v378, 0.0
          %380 = vadd.xlane.f32.xlu0 %v379
          %v381 = vpop.xlane.xlu0 %380
          %v382 = vadd.f32 %v377, %v381
          %383 = vst.msk [vmem:[#allocation3] sm:$0xf] %vm375, %v382
        $region64: #{tpu_custom_call.1} parent=55 // pred_fallthru
          _
        %p384 = scmp.eq.s32.totalorder %s29, 1
        // Predicated region
        $region65: #{tpu_custom_call.1} parent=55 // pred_check
          %p385 = pneg %p384
        $region66: #{tpu_custom_call.1} parent=55 // pred_check_branch
          %387 = sbr.rel (%p385) target = $region68
        $region67: #{tpu_custom_call.1} parent=55 // pred_region
          %v388 = vld [vmem:[#allocation2] sm:$0xf]
          %v389 = vmul.f32 %v388, 0.005
          %v390 = vld [vmem:[#allocation3] sm:$0xf]
          %v391 = vmul.f32 %v390, 0.005
          %v392 = vmul.f32 %v389, %v389
          %v393 = vsub.f32 %v391, %v392
          %v394 = vadd.f32 %v393, 1e-05
          %v395 = vrsqrt.pop %v394
          %v396 = vmul.f32 %v395, %v394
          %v397 = vmul.f32 %v396, %v395
          %v398 = vmul.f32 0.5, %v397
          %v399 = vsub.f32 1.5, %v398
          %v400 = vmul.f32 %v395, %v399
          %vm401 = vweird.f32 %v394
          %vm402 = vweird.f32 %v395
          %vm403 = vmor %vm401, %vm402
          %v404 = vsel %vm403, %v395, %v400
          %v405 = vld [vmem:[%s1] sm:$0xf]
          %v406 = vmul.f32 %v404, %v405
          %v407 = vld [vmem:[%s340] sm:$0xf]
          %409 = vset.pattern.permute.xlu0 0
          %410 = vperm.xlu0 %409, %v389
          %v411 = vpop.permute.xlu0 %410
          %v413 = vsub.f32 %v407, %v411
          %415 = vset.pattern.permute.xlu0 0
          %416 = vperm.xlu0 %415, %v406
          %v417 = vpop.permute.xlu0 %416
          %v419 = vmul.f32 %v413, %v417
          %v420 = vld [vmem:[%s2] sm:$0xf]
          %422 = vset.pattern.permute.xlu0 0
          %423 = vperm.xlu0 %422, %v420
          %v424 = vpop.permute.xlu0 %423
          %v426 = vadd.f32 %v419, %v424
          %v427 = vld [vmem:[%s3] sm:$0xff]
          %v428 = vld [vmem:[%s3 + $0x8] sm:$0x3]
          %v429 = vld [vmem:[%s4] sm:$0xff]
          %v430 = vld [vmem:[%s4 + $0x8] sm:$0x3]
          %432 = vset.pattern.permute.xlu0 0
          %433 = vperm.xlu0 %432, %v429
          %v434 = vpop.permute.xlu0 %433
          %437 = vset.pattern.permute.xlu0 0
          %438 = vperm.xlu0 %437, %v430
          %v439 = vpop.permute.xlu0 %438
          %vm441 = vcmask 31744
          %v443 = vsel %vm441, %v427, 0
          %v446 = vsel %vm441, %v428, 0
          %vm448 = vcmask 1043456
          %v450 = vsel %vm448, %v426, 0
          %452 = vmatpush.msra.mxu0 0.0
          %453 = vmatpush.msra.mxu0 0.0
          %454 = vmatpush.msra.mxu0 0.0
          %455 = vmatpush.msra.mxu0 0.0
          %456 = vmatpush.msra.mxu0 0.0
          %457 = vmatpush.msra.mxu0 0.0
          %458 = vmatpush.msra.mxu0 0.0
          %459 = vmatpush.msra.mxu0 0.0
          %460 = vmatpush.msra.mxu0 0.0
          %461 = vmatpush.msra.mxu0 0.0
          %462 = vmatpush.msra.mxu0 0.0
          %463 = vmatpush.msra.mxu0 0.0
          %464 = vmatpush.msra.mxu0 0.0
          %465 = vmatpush.msra.mxu0 0.0
          %466 = vmatpush.msra.mxu0 0.0
          %467 = vmatpush.msra.mxu0 %v450
          %468 = vmatmul.f32.gmra.mxu0 %v443
          %v469 = vpop.f32.mrf.mxu0
          %v470 = vadd.f32 %v434, %v469
          %471 = vmatmul.f32.gmra.mxu0 %v446
          %v472 = vpop.f32.mrf.mxu0
          %v473 = vadd.f32 %v439, %v472
          %474 = vdwg.mxu0
          %vm475 = vcmp.gt.f32.partialorder %v470, 0.0
          %vm476 = vcmp.gt.f32.partialorder %v473, 0.0
          %v477 = vmul.f32 %v470, 0.5
          %v478 = vmul.f32 %v473, 0.5
          %v479 = vsel %vm475, %v470, %v477
          %v480 = vsel %vm476, %v473, %v478
          %s481 = smul.u32 %s30, 16
          %s482 = scalar_lea.vmem [#allocation6], %s481
          %483 = vst [vmem:[%s482] sm:$0xff] %v479
          %484 = vst [vmem:[%s482 + $0x8] sm:$0x3] %v480
          %v485 = vsel %vm346, 1, 0
          %vm486 = vcmp.eq.s32.totalorder %v485, 1
          %v487 = vsel %vm486, %v479, 0.0
          %v488 = vsel %vm486, %v480, 0.0
          %v489 = vld [vmem:[#allocation4] sm:$0xff]
          %v490 = vld [vmem:[#allocation4 + $0x8] sm:$0x3]
          %491 = vadd.xlane.f32.xlu0 %v487
          %v492 = vpop.xlane.xlu0 %491
          %vm493 = vcmask 1041408
          %v494 = vsel %vm493, %v488, 0.0
          %495 = vadd.xlane.f32.xlu0 %v494
          %v496 = vpop.xlane.xlu0 %495
          %v497 = vadd.f32 %v489, %v492
          %v498 = vadd.f32 %v490, %v496
          %vm499 = vcmask 7168
          %500 = vst.msk [vmem:[#allocation4] sm:$0xff] %vm499, %v497
          %vm501 = vcmask 1024
          %502 = vst.msk [vmem:[#allocation4 + $0x8] sm:$0x3] %vm501, %v498
          %v503 = vld [vmem:[#allocation5] sm:$0xff]
          %v504 = vld [vmem:[#allocation5 + $0x8] sm:$0x3]
          %v505 = vmul.f32 %v487, %v487
          %v506 = vmul.f32 %v488, %v488
          %507 = vadd.xlane.f32.xlu0 %v505
          %v508 = vpop.xlane.xlu0 %507
          %v509 = vsel %vm493, %v506, 0.0
          %510 = vadd.xlane.f32.xlu0 %v509
          %v511 = vpop.xlane.xlu0 %510
          %v512 = vadd.f32 %v503, %v508
          %v513 = vadd.f32 %v504, %v511
          %514 = vst.msk [vmem:[#allocation5] sm:$0xff] %vm499, %v512
          %515 = vst.msk [vmem:[#allocation5 + $0x8] sm:$0x3] %vm501, %v513
        $region68: #{tpu_custom_call.1} parent=55 // pred_fallthru
          _
        %p516 = scmp.eq.s32.totalorder %s29, 2
        // Predicated region
        $region69: #{tpu_custom_call.1} parent=55 // pred_check
          %p517 = pneg %p516
        $region70: #{tpu_custom_call.1} parent=55 // pred_check_branch
          %519 = sbr.rel (%p517) target = $region72
        $region71: #{tpu_custom_call.1} parent=55 // pred_region
          %v520 = vld [vmem:[#allocation4] sm:$0xff]
          %v521 = vld [vmem:[#allocation4 + $0x8] sm:$0x3]
          %v522 = vmul.f32 %v520, 0.005
          %v523 = vmul.f32 %v521, 0.005
          %v524 = vld [vmem:[#allocation5] sm:$0xff]
          %v525 = vld [vmem:[#allocation5 + $0x8] sm:$0x3]
          %v526 = vmul.f32 %v524, 0.005
          %v527 = vmul.f32 %v525, 0.005
          %v528 = vmul.f32 %v522, %v522
          %v529 = vmul.f32 %v523, %v523
          %v530 = vsub.f32 %v526, %v528
          %v531 = vsub.f32 %v527, %v529
          %v532 = vadd.f32 %v530, 1e-05
          %v533 = vadd.f32 %v531, 1e-05
          %v534 = vrsqrt.pop %v532
          %v535 = vmul.f32 %v534, %v532
          %v536 = vmul.f32 %v535, %v534
          %v537 = vmul.f32 0.5, %v536
          %v538 = vsub.f32 1.5, %v537
          %v539 = vmul.f32 %v534, %v538
          %vm540 = vweird.f32 %v532
          %vm541 = vweird.f32 %v534
          %vm542 = vmor %vm540, %vm541
          %v543 = vsel %vm542, %v534, %v539
          %v544 = vrsqrt.pop %v533
          %v545 = vmul.f32 %v544, %v533
          %v546 = vmul.f32 %v545, %v544
          %v547 = vmul.f32 0.5, %v546
          %v548 = vsub.f32 1.5, %v547
          %v549 = vmul.f32 %v544, %v548
          %vm550 = vweird.f32 %v533
          %vm551 = vweird.f32 %v544
          %vm552 = vmor %vm550, %vm551
          %v553 = vsel %vm552, %v544, %v549
          %v554 = vld [vmem:[%s5] sm:$0xff]
          %v555 = vld [vmem:[%s5 + $0x8] sm:$0x3]
          %v556 = vmul.f32 %v543, %v554
          %v557 = vmul.f32 %v553, %v555
          %s558 = smul.u32 %s30, 16
          %s559 = scalar_lea.vmem [#allocation6], %s558
          %v560 = vld [vmem:[%s559] sm:$0xff]
          %v561 = vld [vmem:[%s559 + $0x8] sm:$0x3]
          %563 = vset.pattern.permute.xlu0 0
          %564 = vperm.xlu0 %563, %v522
          %v565 = vpop.permute.xlu0 %564
          %568 = vset.pattern.permute.xlu0 0
          %569 = vperm.xlu0 %568, %v523
          %v570 = vpop.permute.xlu0 %569
          %v572 = vsub.f32 %v560, %v565
          %v573 = vsub.f32 %v561, %v570
          %575 = vset.pattern.permute.xlu0 0
          %576 = vperm.xlu0 %575, %v556
          %v577 = vpop.permute.xlu0 %576
          %580 = vset.pattern.permute.xlu0 0
          %581 = vperm.xlu0 %580, %v557
          %v582 = vpop.permute.xlu0 %581
          %v584 = vmul.f32 %v572, %v577
          %v585 = vmul.f32 %v573, %v582
          %v586 = vld [vmem:[%s6] sm:$0xff]
          %v587 = vld [vmem:[%s6 + $0x8] sm:$0x3]
          %589 = vset.pattern.permute.xlu0 0
          %590 = vperm.xlu0 %589, %v586
          %v591 = vpop.permute.xlu0 %590
          %594 = vset.pattern.permute.xlu0 0
          %595 = vperm.xlu0 %594, %v587
          %v596 = vpop.permute.xlu0 %595
          %v598 = vadd.f32 %v584, %v591
          %v599 = vadd.f32 %v585, %v596
          %v600 = vld [vmem:[%s7] sm:$0xff]
          %v601 = vld [vmem:[%s7 + $0x8] sm:$0x3]
          %603 = vset.pattern.permute.xlu0 0
          %604 = vperm.xlu0 %603, %v600
          %v605 = vpop.permute.xlu0 %604
          %608 = vset.pattern.permute.xlu0 0
          %609 = vperm.xlu0 %608, %v601
          %v610 = vpop.permute.xlu0 %609
          %v612 = vmul.f32 %v598, %v605
          %v613 = vmul.f32 %v599, %v610
          %vm614 = vcmask 1041408
          %v615 = vsel %vm614, %v613, 0.0
          %v616 = vadd.f32 %v612, %v615
          %v617 = vrot.slane %v616, 4
          %v618 = vadd.f32 %v616, %v617
          %v619 = vrot.slane %v618, 2
          %v620 = vadd.f32 %v618, %v619
          %v621 = vrot.slane %v620, 1
          %v622 = vadd.f32 %v620, %v621
          %v623 = vld [vmem:[#allocation7] sm:$0x1]
          %625 = vset.pattern.permute.xlu0 0
          %626 = vperm.xlu0 %625, %v623
          %v627 = vpop.permute.xlu0 %626
          %v629 = vperm.slane %v627, 0
          %v630 = vadd.f32 %v622, %v629
          %v631 = vxor.u32 %v630, 2147483648
          %v632 = vmul.f32 %v631, 1.442695
          %v633 = vpow.pop %v632
          %v634 = vadd.f32 %v633, 1.0
          %v635 = vrcp.pop %v634
          %v636 = vmul.f32 %v634, %v635
          %v637 = vsub.f32 1.0, %v636
          %v638 = vmul.f32 %v635, %v637
          %v639 = vadd.f32 %v635, %v638
          %vm640 = vweird.f32 %v634
          %vm641 = vweird.f32 %v635
          %vm642 = vmor %vm640, %vm641
          %v643 = vsel %vm642, %v635, %v639
          %v644 = vand.u32 2147483647, %v634
          %vm645 = vcmp.eq.f32.partialorder %v644, 8.507059e+37
          %v646 = vand.u32 %v634, 2147483648
          %v647 = vor.u32 1.1754944e-38, %v646
          %v648 = vsel %vm645, %v647, %v643
          %v649 = vmul.f32 1.0, %v648
          %650 = vst [vmem:[%s336] sm:$0x1] %v649
        $region72: #{tpu_custom_call.1} parent=55 // pred_fallthru
          _
        %s651 = sand.u32 %s239, 1
        %s652 = scalar_lea.sflag [#allocation9], %s651
        %s653 = sand.u32 %s239, 1
        %s654 = scalar_lea.vmem [#allocation8], %s653
        // Predicated region
        $region73: #{tpu_custom_call.1} parent=55 // pred_check
          %p655 = pneg %p249
        $region74: #{tpu_custom_call.1} parent=55 // pred_check_branch
          %657 = sbr.rel (%p655) target = $region76
        $region75: #{tpu_custom_call.1} parent=55 // pred_region
          %659 = vsyncadd %s652, 0
          %s660 = scalar_lea.hbm %s9, %s30
          %s662 = sshll.u32 %s654, 4
          %s663 = int_to_ptr.vmem [resolvable:$true] %s662
          %s664 = sshll.u32 %s660, 4
          %s665 = int_to_ptr.hbm [resolvable:$true] %s664
          %667 = dma.vmem_to_hbm [thread:$0]  %s663, 16, %s665, %s652
        $region76: #{tpu_custom_call.1} parent=55 // pred_fallthru
          _
      $region56: #{tpu_custom_call.1} parent=5 // pred_fallthru
        _
      %p668 = scmp.le.s32.totalorder 2, %s20
      // Predicated region
      $region77: #{tpu_custom_call.1} parent=5 // pred_check
        %p669 = pneg %p668
      $region78: #{tpu_custom_call.1} parent=5 // pred_check_branch
        %671 = sbr.rel (%p669) target = $region80
      $region79: #{tpu_custom_call.1} parent=5 // pred_region
        %s672 = ssub.s32 %s20, 2
        // Predicated region
        $region81: #{tpu_custom_call.1} parent=79 // pred_check
          %p673 = pneg %p255
        $region82: #{tpu_custom_call.1} parent=79 // pred_check_branch
          %675 = sbr.rel (%p673) target = $region84
        $region83: #{tpu_custom_call.1} parent=79 // pred_region
          %s676 = sand.u32 %s240, 1
          %s677 = scalar_lea.sflag [#allocation9], %s676
          %s678 = sand.u32 %s240, 1
          %s679 = scalar_lea.vmem [#allocation8], %s678
          %681 = dma.done %s677, 16
        $region84: #{tpu_custom_call.1} parent=79 // pred_fallthru
          _
      $region80: #{tpu_custom_call.1} parent=5 // pred_fallthru
        _
    $region6: #{tpu_custom_call.1} parent=1 // loop_footer
      %s24 = sadd.s32 1, %s20
    $region7: #{tpu_custom_call.1} parent=1 // loop_footer_branch
      %19 = sbr.rel target = $region3
    $region8: #{tpu_custom_call.1} parent=1 // loop_exit
      _
    %682 = vsyncpa [#allocation9], 1
    %s683 = scalar_lea.sflag [#allocation9], 1
    %684 = vsyncpa %s683, 1

</llo_original>
